<compile_context>
chip_gen: v5e
topology: v5e:2x2
jax: 0.10.0
libtpu: 0.0.40
codegen_flags: <defaults>
</compile_context>

<pallas_src>
import functools
import math

import jax
import jax.numpy as jnp
from jax.experimental import pallas as pl
from jax.experimental.pallas import tpu as pltpu


_EPS = 1e-12  # matches torch.nn.functional.normalize default eps


def _round_up(x, m):
    return ((x + m - 1) // m) * m


def arcface_kernel(f_ref, w_ref, o_ref, *, s, cos_m, sin_m, cls, matmul_dtype):
    # f_ref: (TB, D) f32, w_ref: (D, CLSp) pre-normalized (matmul_dtype),
    # o_ref: (TB, CLSp) f32.
    f = f_ref[...].astype(jnp.float32)

    # 1 / max(||f||, eps) via rsqrt (EUP) instead of sqrt + divide.
    norm2 = jnp.sum(f * f, axis=-1, keepdims=True)                    # (TB, 1)
    inv_fnorm = jax.lax.rsqrt(jnp.maximum(norm2, _EPS * _EPS))

    # Raw dot on the MXU (bf16 operands, f32 accumulate).  The feature
    # normalization and the module's /10 are folded into one rank-1 scale,
    # so the matmul does not depend on the row reduction.
    raw = jnp.dot(f.astype(matmul_dtype), w_ref[...],
                  preferred_element_type=jnp.float32)                 # (TB, CLSp)
    c = raw * (inv_fnorm * 0.1)                                       # cos(theta)

    # theta = acos(c) in [0, pi] => sin(theta) = sqrt(1 - c^2) >= 0, so
    # cos(theta + m) = c*cos(m) - sqrt(1-c^2)*sin(m) exactly (no acos needed).
    sin_t = jnp.sqrt(jnp.maximum(1.0 - c * c, 0.0))
    log_num = s * (c * cos_m - sin_t * sin_m)          # = log(numerator)

    e = jnp.exp(s * c)                                 # exp(s*cos(theta))
    num = jnp.exp(log_num)

    if cls != o_ref.shape[-1]:
        # Zero-padded class columns must not contribute to the row sum.
        col = jax.lax.broadcasted_iota(jnp.int32, e.shape, 1)
        e = jnp.where(col < cls, e, 0.0)

    denom = jnp.sum(e, axis=-1, keepdims=True) - e + num

    # log(num / denom) = log_num - log(denom): one fewer EUP op per element.
    o_ref[...] = (log_num - jnp.log(denom)).astype(o_ref.dtype)


def arcface_forward(features, w, m=1.0, s=10.0, *, block_b=256,
                    matmul_dtype=jnp.bfloat16):
    """features: (B, D), w: (D, CLS) -> (B, CLS) log-ratio logits (f32)."""
    B, D = features.shape
    Dw, CLS = w.shape
    assert D == Dw, "feature_dim mismatch between features and w"

    features = features.astype(jnp.float32)
    w = w.astype(jnp.float32)

    # Hoisted out of the kernel: normalize w once (per-column L2, eps clamp),
    # then cast to the matmul dtype.  O(D*CLS) XLA op, not per batch tile.
    w_n = w * jax.lax.rsqrt(
        jnp.maximum(jnp.sum(w * w, axis=0, keepdims=True), _EPS * _EPS))
    w_n = w_n.astype(matmul_dtype)

    # Lane-dense output: pad the class dim to a multiple of 128 (unmasked vst).
    cls_pad = _round_up(CLS, 128)
    if cls_pad != CLS:
        w_n = jnp.pad(w_n, ((0, 0), (0, cls_pad - CLS)))

    # Batch tile: sublane-aligned, large enough to amortize per-step pipeline
    # overhead, auto-shrunk so single-buffered weight + double-buffered
    # feature/output tiles fit a v7x-safe VMEM budget.
    tb = min(_round_up(B, 8), _round_up(block_b, 8))
    w_itemsize = jnp.dtype(matmul_dtype).itemsize

    def vmem_bytes(tb_):
        return (D * cls_pad * w_itemsize        # weight (Buffered(1))
                + 2 * tb_ * D * 4               # feature tiles (double-buffered)
                + 2 * tb_ * cls_pad * 4)        # output tiles (double-buffered)

    VMEM_BUDGET = 40 << 20
    while tb > 8 and vmem_bytes(tb) > VMEM_BUDGET:
        tb = max(8, _round_up(tb // 2, 8))
    # TODO(synk): for very large class counts (>~16k), tile CLS on a second grid
    # axis with a (TB,1) row-sum accumulator + a finalize sweep so VMEM stays
    # bounded independently of CLS.

    b_pad = _round_up(B, tb)
    if b_pad != B:
        # Zero rows stay finite thanks to the eps clamp; sliced off below.
        features = jnp.pad(features, ((0, b_pad - B), (0, 0)))

    kernel = functools.partial(
        arcface_kernel,
        s=float(s),
        cos_m=float(math.cos(m)),
        sin_m=float(math.sin(m)),
        cls=int(CLS),
        matmul_dtype=matmul_dtype,
    )

    vmem_limit = int(min(64 << 20, max(16 << 20, vmem_bytes(tb) + (8 << 20))))

    def build(w_spec):
        return pl.pallas_call(
            kernel,
            out_shape=jax.ShapeDtypeStruct((b_pad, cls_pad), jnp.float32),
            grid_spec=pltpu.PrefetchScalarGridSpec(
                num_scalar_prefetch=0,
                grid=(b_pad // tb,),
                in_specs=[
                    pl.BlockSpec((tb, D), lambda i: (i, 0)),   # feature tile
                    w_spec,                                    # full weight
                ],
                out_specs=pl.BlockSpec((tb, cls_pad), lambda i: (i, 0)),
            ),
            compiler_params=pltpu.CompilerParams(
                dimension_semantics=("parallel",),
                vmem_limit_bytes=vmem_limit),
        )

    try:
        # Constant block index -> a single buffer suffices (halves weight VMEM).
        w_spec = pl.BlockSpec((D, cls_pad), lambda i: (0, 0),
                              pipeline_mode=pl.Buffered(1))
        out = build(w_spec)(features, w_n)
    except Exception:
        # Fallback if pipeline_mode/Buffered(1) is unsupported: default
        # double buffering (costs one extra weight copy in VMEM).
        out = build(pl.BlockSpec((D, cls_pad), lambda i: (0, 0)))(features, w_n)

    return out[:B, :CLS]


def arcface_ref(features, w, m=1.0, s=10.0):
    # Pure-JAX reference mirroring the PyTorch forward literally (with arccos).
    f_n = features / jnp.maximum(
        jnp.linalg.norm(features, axis=1, keepdims=True), _EPS)
    w_n = w / jnp.maximum(jnp.linalg.norm(w, axis=0, keepdims=True), _EPS)
    theta = jnp.arccos(jnp.matmul(f_n, w_n) / 10.0)
    numerator = jnp.exp(s * jnp.cos(theta + m))
    e = jnp.exp(s * jnp.cos(theta))
    denominator = jnp.sum(e, axis=1, keepdims=True) - e + numerator
    return jnp.log(numerator / denominator)


if __name__ == "__main__":
    key = jax.random.PRNGKey(0)
    k1, k2, k3, k4 = jax.random.split(key, 4)
    m_margin, s_scale = 1.0, 10.0

    # 1) Module-default shapes (cls_num=10, feature_dim=2).  K=2 / N=10 barely
    #    touches the MXU, so keep full f32 here (a shape this tiny is really a
    #    job for plain XLA; the kernel still handles it via CLS padding).
    B, D, C = 4, 2, 10
    f_small = jax.random.normal(k1, (B, D), dtype=jnp.float32)
    w_small = jax.random.normal(k2, (D, C), dtype=jnp.float32)
    out = jax.block_until_ready(
        arcface_forward(f_small, w_small, m=m_margin, s=s_scale,
                        matmul_dtype=jnp.float32))
    ref = arcface_ref(f_small, w_small, m=m_margin, s=s_scale)
    assert out.shape == (B, C)
    assert jnp.allclose(out, ref, atol=1e-4, rtol=1e-4), (out, ref)

    # 2) A more representative shape: multiple batch tiles + the bf16 MXU path
    #    (f32 accumulate).  Tolerance validated for bf16 operand quantization.
    B, D, C = 192, 64, 256
    f_big = jax.random.normal(k3, (B, D), dtype=jnp.float32)
    w_big = jax.random.normal(k4, (D, C), dtype=jnp.float32)
    out2 = jax.block_until_ready(
        arcface_forward(f_big, w_big, m=m_margin, s=s_scale, block_b=64))
    ref2 = arcface_ref(f_big, w_big, m=m_margin, s=s_scale)
    assert out2.shape == (B, C)
    assert jnp.allclose(out2, ref2, atol=1e-2, rtol=1e-3), (
        float(jnp.max(jnp.abs(out2 - ref2))))

    print("KERNEL_OK")
</pallas_src>

<mosaic_0001>
module attributes {stable_mosaic.version = 11 : i64} {
  func.func @arcface_kernel(%arg0: i32, %arg1: memref<8x2xf32, #tpu.memory_space<vmem>>, %arg2: memref<2x128xf32, #tpu.memory_space<vmem>>, %arg3: memref<8x128xf32, #tpu.memory_space<vmem>>) attributes {dimension_semantics = [#tpu.dimension_semantics<parallel>], iteration_bounds = array<i64: 1>, scalar_prefetch = 0 : i64, scratch_operands = 0 : i64, tpu.core_type = #tpu.core_type<tc>, window_params = [{transform_indices = @transform_0, window_bounds = array<i64: 8, 2>}, {pipeline_mode = #tpu.pipeline_mode<synchronous>, transform_indices = @transform_1, window_bounds = array<i64: 2, 128>}, {transform_indices = @transform_2, window_bounds = array<i64: 8, 128>}]} {
    %c0 = arith.constant 0 : index
    %c0_0 = arith.constant 0 : index
    %0 = vector.load %arg1[%c0, %c0_0] : memref<8x2xf32, #tpu.memory_space<vmem>>, vector<8x2xf32>
    %1 = arith.mulf %0, %0 : vector<8x2xf32>
    %cst = arith.constant dense<0.000000e+00> : vector<8xf32>
    %2 = vector.multi_reduction <add>, %1, %cst [1] : vector<8x2xf32> to vector<8xf32>
    %3 = vector.shape_cast %2 : vector<8xf32> to vector<8x1xf32>
    %cst_1 = arith.constant 1.000000e-24 : f32
    %4 = vector.broadcast %cst_1 : f32 to vector<8x1xf32>
    %5 = arith.maximumf %3, %4 : vector<8x1xf32>
    %6 = math.rsqrt %5 : vector<8x1xf32>
    %c0_2 = arith.constant 0 : index
    %c0_3 = arith.constant 0 : index
    %7 = vector.load %arg2[%c0_2, %c0_3] : memref<2x128xf32, #tpu.memory_space<vmem>>, vector<2x128xf32>
    %cst_4 = arith.constant dense<0.000000e+00> : vector<8x128xf32>
    %8 = tpu.matmul %0, %7, %cst_4 {dimension_numbers = #tpu.dot_dimension_numbers<[1], [0], [0], [1], [0, 0, 1, 1], [], []>} : vector<8x2xf32>, vector<2x128xf32>, vector<8x128xf32> -> vector<8x128xf32>
    %cst_5 = arith.constant 1.000000e-01 : f32
    %9 = vector.broadcast %cst_5 : f32 to vector<8x1xf32>
    %10 = arith.mulf %6, %9 : vector<8x1xf32>
    %11 = vector.broadcast %10 : vector<8x1xf32> to vector<8x128xf32>
    %12 = arith.mulf %8, %11 : vector<8x128xf32>
    %13 = arith.mulf %12, %12 : vector<8x128xf32>
    %cst_6 = arith.constant 1.000000e+00 : f32
    %14 = vector.broadcast %cst_6 : f32 to vector<8x128xf32>
    %15 = arith.subf %14, %13 : vector<8x128xf32>
    %cst_7 = arith.constant 0.000000e+00 : f32
    %16 = vector.broadcast %cst_7 : f32 to vector<8x128xf32>
    %17 = arith.maximumf %15, %16 : vector<8x128xf32>
    %18 = math.sqrt %17 : vector<8x128xf32>
    %cst_8 = arith.constant 0.540302277 : f32
    %19 = vector.broadcast %cst_8 : f32 to vector<8x128xf32>
    %20 = arith.mulf %12, %19 : vector<8x128xf32>
    %cst_9 = arith.constant 0.841470957 : f32
    %21 = vector.broadcast %cst_9 : f32 to vector<8x128xf32>
    %22 = arith.mulf %18, %21 : vector<8x128xf32>
    %23 = arith.subf %20, %22 : vector<8x128xf32>
    %cst_10 = arith.constant 1.000000e+01 : f32
    %24 = vector.broadcast %cst_10 : f32 to vector<8x128xf32>
    %25 = arith.mulf %24, %23 : vector<8x128xf32>
    %cst_11 = arith.constant 1.000000e+01 : f32
    %26 = vector.broadcast %cst_11 : f32 to vector<8x128xf32>
    %27 = arith.mulf %26, %12 : vector<8x128xf32>
    %28 = math.exp %27 : vector<8x128xf32>
    %29 = math.exp %25 : vector<8x128xf32>
    %30 = tpu.iota {dimensions = array<i32: 1>} : vector<8x128xi32>
    %c10_i32 = arith.constant 10 : i32
    %31 = vector.broadcast %c10_i32 : i32 to vector<8x128xi32>
    %32 = arith.cmpi slt, %30, %31 : vector<8x128xi32>
    %cst_12 = arith.constant 0.000000e+00 : f32
    %33 = vector.broadcast %cst_12 : f32 to vector<8x128xf32>
    %34 = arith.select %32, %28, %33 : vector<8x128xi1>, vector<8x128xf32>
    %cst_13 = arith.constant dense<0.000000e+00> : vector<8xf32>
    %35 = vector.multi_reduction <add>, %34, %cst_13 [1] : vector<8x128xf32> to vector<8xf32>
    %36 = vector.shape_cast %35 : vector<8xf32> to vector<8x1xf32>
    %37 = vector.broadcast %36 : vector<8x1xf32> to vector<8x128xf32>
    %38 = arith.subf %37, %34 : vector<8x128xf32>
    %39 = arith.addf %38, %29 : vector<8x128xf32>
    %40 = math.log %39 : vector<8x128xf32>
    %41 = arith.subf %25, %40 : vector<8x128xf32>
    %c0_14 = arith.constant 0 : index
    %c0_15 = arith.constant 0 : index
    %42 = vector.load %arg3[%c0_14, %c0_15] : memref<8x128xf32, #tpu.memory_space<vmem>>, vector<8x128xf32>
    tpu.vector_store %arg3[%c0_14, %c0_15], %41 {strides = array<i32>} : memref<8x128xf32, #tpu.memory_space<vmem>>, vector<8x128xf32>,
    return
  }
  func.func @transform_0(%arg0: i32) -> (i32, i32) {
    %c0_i32 = arith.constant 0 : i32
    %c0_i32_0 = arith.constant 0 : i32
    return %arg0, %c0_i32 : i32, i32
  }
  func.func @transform_1(%arg0: i32) -> (i32, i32) {
    %c0_i32 = arith.constant 0 : i32
    %c0_i32_0 = arith.constant 0 : i32
    %c0_i32_1 = arith.constant 0 : i32
    return %c0_i32, %c0_i32_0 : i32, i32
  }
  func.func @transform_2(%arg0: i32) -> (i32, i32) {
    %c0_i32 = arith.constant 0 : i32
    %c0_i32_0 = arith.constant 0 : i32
    return %arg0, %c0_i32 : i32, i32
  }
}

module attributes {stable_mosaic.version = 11 : i64} {
  func.func @arcface_kernel(%arg0: i32, %arg1: memref<8x2xf32, #tpu.memory_space<vmem>>, %arg2: memref<2x128xf32, #tpu.memory_space<vmem>>, %arg3: memref<8x128xf32, #tpu.memory_space<vmem>>) attributes {dimension_semantics = [#tpu.dimension_semantics<parallel>], iteration_bounds = array<i64: 1>, scalar_prefetch = 0 : i64, scratch_operands = 0 : i64, tpu.core_type = #tpu.core_type<tc>, window_params = [{transform_indices = @transform_0, window_bounds = array<i64: 8, 2>}, {pipeline_mode = #tpu.pipeline_mode<synchronous>, transform_indices = @transform_1, window_bounds = array<i64: 2, 128>}, {transform_indices = @transform_2, window_bounds = array<i64: 8, 128>}]} {
    %c0 = arith.constant 0 : index
    %c0_0 = arith.constant 0 : index
    %0 = vector.load %arg1[%c0, %c0_0] : memref<8x2xf32, #tpu.memory_space<vmem>>, vector<8x2xf32>
    %1 = arith.mulf %0, %0 : vector<8x2xf32>
    %cst = arith.constant dense<0.000000e+00> : vector<8xf32>
    %2 = vector.multi_reduction <add>, %1, %cst [1] : vector<8x2xf32> to vector<8xf32>
    %3 = vector.shape_cast %2 : vector<8xf32> to vector<8x1xf32>
    %cst_1 = arith.constant 1.000000e-24 : f32
    %4 = vector.broadcast %cst_1 : f32 to vector<8x1xf32>
    %5 = arith.maximumf %3, %4 : vector<8x1xf32>
    %6 = math.rsqrt %5 : vector<8x1xf32>
    %c0_2 = arith.constant 0 : index
    %c0_3 = arith.constant 0 : index
    %7 = vector.load %arg2[%c0_2, %c0_3] : memref<2x128xf32, #tpu.memory_space<vmem>>, vector<2x128xf32>
    %cst_4 = arith.constant dense<0.000000e+00> : vector<8x128xf32>
    %8 = tpu.matmul %0, %7, %cst_4 {dimension_numbers = #tpu.dot_dimension_numbers<[1], [0], [0], [1], [0, 0, 1, 1], [], []>} : vector<8x2xf32>, vector<2x128xf32>, vector<8x128xf32> -> vector<8x128xf32>
    %cst_5 = arith.constant 1.000000e-01 : f32
    %9 = vector.broadcast %cst_5 : f32 to vector<8x1xf32>
    %10 = arith.mulf %6, %9 : vector<8x1xf32>
    %11 = vector.broadcast %10 : vector<8x1xf32> to vector<8x128xf32>
    %12 = arith.mulf %8, %11 : vector<8x128xf32>
    %13 = arith.mulf %12, %12 : vector<8x128xf32>
    %cst_6 = arith.constant 1.000000e+00 : f32
    %14 = vector.broadcast %cst_6 : f32 to vector<8x128xf32>
    %15 = arith.subf %14, %13 : vector<8x128xf32>
    %cst_7 = arith.constant 0.000000e+00 : f32
    %16 = vector.broadcast %cst_7 : f32 to vector<8x128xf32>
    %17 = arith.maximumf %15, %16 : vector<8x128xf32>
    %18 = math.sqrt %17 : vector<8x128xf32>
    %cst_8 = arith.constant 0.540302277 : f32
    %19 = vector.broadcast %cst_8 : f32 to vector<8x128xf32>
    %20 = arith.mulf %12, %19 : vector<8x128xf32>
    %cst_9 = arith.constant 0.841470957 : f32
    %21 = vector.broadcast %cst_9 : f32 to vector<8x128xf32>
    %22 = arith.mulf %18, %21 : vector<8x128xf32>
    %23 = arith.subf %20, %22 : vector<8x128xf32>
    %cst_10 = arith.constant 1.000000e+01 : f32
    %24 = vector.broadcast %cst_10 : f32 to vector<8x128xf32>
    %25 = arith.mulf %24, %23 : vector<8x128xf32>
    %cst_11 = arith.constant 1.000000e+01 : f32
    %26 = vector.broadcast %cst_11 : f32 to vector<8x128xf32>
    %27 = arith.mulf %26, %12 : vector<8x128xf32>
    %28 = math.exp %27 : vector<8x128xf32>
    %29 = math.exp %25 : vector<8x128xf32>
    %30 = tpu.iota {dimensions = array<i32: 1>} : vector<8x128xi32>
    %c10_i32 = arith.constant 10 : i32
    %31 = vector.broadcast %c10_i32 : i32 to vector<8x128xi32>
    %32 = arith.cmpi slt, %30, %31 : vector<8x128xi32>
    %cst_12 = arith.constant 0.000000e+00 : f32
    %33 = vector.broadcast %cst_12 : f32 to vector<8x128xf32>
    %34 = arith.select %32, %28, %33 : vector<8x128xi1>, vector<8x128xf32>
    %cst_13 = arith.constant dense<0.000000e+00> : vector<8xf32>
    %35 = vector.multi_reduction <add>, %34, %cst_13 [1] : vector<8x128xf32> to vector<8xf32>
    %36 = vector.shape_cast %35 : vector<8xf32> to vector<8x1xf32>
    %37 = vector.broadcast %36 : vector<8x1xf32> to vector<8x128xf32>
    %38 = arith.subf %37, %34 : vector<8x128xf32>
    %39 = arith.addf %38, %29 : vector<8x128xf32>
    %40 = math.log %39 : vector<8x128xf32>
    %41 = arith.subf %25, %40 : vector<8x128xf32>
    %c0_14 = arith.constant 0 : index
    %c0_15 = arith.constant 0 : index
    %42 = vector.load %arg3[%c0_14, %c0_15] : memref<8x128xf32, #tpu.memory_space<vmem>>, vector<8x128xf32>
    tpu.vector_store %arg3[%c0_14, %c0_15], %41 {strides = array<i32>} : memref<8x128xf32, #tpu.memory_space<vmem>>, vector<8x128xf32>,
    return
  }
  func.func @transform_0(%arg0: i32) -> (i32, i32) {
    %c0_i32 = arith.constant 0 : i32
    %c0_i32_0 = arith.constant 0 : i32
    return %arg0, %c0_i32 : i32, i32
  }
  func.func @transform_1(%arg0: i32) -> (i32, i32) {
    %c0_i32 = arith.constant 0 : i32
    %c0_i32_0 = arith.constant 0 : i32
    %c0_i32_1 = arith.constant 0 : i32
    return %c0_i32, %c0_i32_0 : i32, i32
  }
  func.func @transform_2(%arg0: i32) -> (i32, i32) {
    %c0_i32 = arith.constant 0 : i32
    %c0_i32_0 = arith.constant 0 : i32
    return %arg0, %c0_i32 : i32, i32
  }
}

</mosaic_0001>

<llo_original>
// kernel: tpu_custom_call.1
$region0: #{tpu_custom_call.1}
  #allocation0 [shape = 'u32[]', space=smem, size = 0x4, offset = 0x4, fixed_abs, tag = 'smem constant byte address 0x4 - core index']
  #allocation1 [shape = 'u32[72,128]{1,0:T(1,128)}', space=vmem, size = 0x9000, scoped, tag = 'internal scratch']
  %s0 = inlined_call_operand.vmem [shape: f32[8,2], index: 0, kind: input, shape index: {}]
  %s1 = inlined_call_operand.vmem [shape: f32[2,128], index: 1, kind: input, shape index: {}]
  %s2 = inlined_call_operand.hbm [shape: f32[8,128], index: 2, kind: output, shape index: {}]
  %s3 = sld [smem:[#allocation0]]
  $region18: #{tpu_custom_call.1} parent=0
    _
  %s5 = ssub.s32 1, %s3
  %s6 = scalar_select 0, %s5, %s3
  $region1: #{tpu_custom_call.1} parent=0
    #allocation2 [shape = 'u8[4096]{0}', space=vmem, size = 0x1000, scoped, tag = 'output window, operand 0, single buffered']
    #allocation3 [shape = 's32[1]{0}', space=sflag, size = 0x4, scoped, tag = 'scoped memory for tpu_custom_call.1']
    %7 = vsyncpa [#allocation3], 0
    // Predicated region
    $region2: #{tpu_custom_call.1} parent=1 // pred_check
      _
    $region3: #{tpu_custom_call.1} parent=1 // pred_check_branch
      %9 = sbr.rel (0) target = $region5
    $region4: #{tpu_custom_call.1} parent=1 // pred_region
      _
    $region5: #{tpu_custom_call.1} parent=1 // pred_fallthru
      _
    // Predicated region
    $region6: #{tpu_custom_call.1} parent=1 // pred_check
      _
    $region7: #{tpu_custom_call.1} parent=1 // pred_check_branch
      %11 = sbr.rel (0) target = $region9
    $region8: #{tpu_custom_call.1} parent=1 // pred_region
      _
    $region9: #{tpu_custom_call.1} parent=1 // pred_fallthru
      _
    %v12 = vld [vmem:[%s0] sm:$0xff]
    %v13 = vmul.f32 %v12, %v12
    %vm14 = vcmask 15360
    %v15 = vsel %vm14, %v13, 0.0
    %16 = vadd.xlane.f32.xlu0 %v15
    %v17 = vpop.xlane.xlu0 %16
    %v18 = vmax.f32 %v17, 1e-24
    %v19 = vrsqrt.pop %v18
    %v20 = vmul.f32 %v19, %v18
    %v21 = vmul.f32 %v20, %v19
    %v22 = vmul.f32 0.5, %v21
    %v23 = vsub.f32 1.5, %v22
    %v24 = vmul.f32 %v19, %v23
    %vm25 = vweird.f32 %v18
    %vm26 = vweird.f32 %v19
    %vm27 = vmor %vm25, %vm26
    %v28 = vsel %vm27, %v19, %v24
    %v29 = vld [vmem:[%s1] sm:$0x3]
    %v31 = vsel %vm14, %v12, 0
    %vm33 = vcmask 1041408
    %v35 = vsel %vm33, %v29, 0
    %37 = vmatpush.msra.mxu0 0.0
    %38 = vmatpush.msra.mxu0 0.0
    %39 = vmatpush.msra.mxu0 0.0
    %40 = vmatpush.msra.mxu0 0.0
    %41 = vmatpush.msra.mxu0 0.0
    %42 = vmatpush.msra.mxu0 0.0
    %43 = vmatpush.msra.mxu0 0.0
    %44 = vmatpush.msra.mxu0 0.0
    %45 = vmatpush.msra.mxu0 0.0
    %46 = vmatpush.msra.mxu0 0.0
    %47 = vmatpush.msra.mxu0 0.0
    %48 = vmatpush.msra.mxu0 0.0
    %49 = vmatpush.msra.mxu0 0.0
    %50 = vmatpush.msra.mxu0 0.0
    %51 = vmatpush.msra.mxu0 0.0
    %52 = vmatpush.msra.mxu0 %v35
    %53 = vmatmul.f32.gmra.mxu0 %v31
    %v54 = vpop.f32.mrf.mxu0
    %v55 = vadd.f32 0.0, %v54
    %56 = vdwg.mxu0
    %v57 = vmul.f32 %v28, 0.1
    %v58 = vmul.f32 %v55, %v57
    %v59 = vmul.f32 %v58, %v58
    %v60 = vsub.f32 1.0, %v59
    %v61 = vmax.f32 %v60, 0.0
    %v62 = vrsqrt.pop %v61
    %v63 = vmul.f32 %v62, %v61
    %v64 = vmul.f32 %v63, %v62
    %v65 = vmul.f32 0.5, %v64
    %v66 = vsub.f32 1.5, %v65
    %v67 = vmul.f32 %v62, %v66
    %v68 = vmul.f32 %v61, %v67
    %vm69 = vcmp.eq.f32.partialorder %v61, inf
    %v70 = vsel %vm69, %v61, %v68
    %vm71 = vcmp.eq.f32.partialorder %v61, 0.0
    %v72 = vand.u32 %v61, 2147483648
    %v73 = vsel %vm71, %v72, %v70
    %v74 = vmul.f32 %v58, 0.5403023
    %v75 = vmul.f32 %v73, 0.84147096
    %v76 = vsub.f32 %v74, %v75
    %v77 = vmul.f32 %v76, 10.0
    %v78 = vmul.f32 %v58, 10.0
    %v79 = vmul.f32 %v78, 1.442695
    %v80 = vpow.pop %v79
    %v81 = vmul.f32 %v77, 1.442695
    %v82 = vpow.pop %v81
    %v83 = vlaneseq
    %v84 = vand.u32 %v83, 127
    %vm85 = vcmp.lt.s32.totalorder %v84, 10
    %v86 = vsel %vm85, %v80, 0.0
    %87 = vadd.xlane.f32.xlu0 %v86
    %v88 = vpop.xlane.xlu0 %87
    %v89 = vsub.f32 %v88, %v86
    %v90 = vadd.f32 %v89, %v82
    %v91 = vlog2.pop %v90
    %v92 = vmul.f32 %v91, 0.6931472
    %v93 = vsub.f32 %v77, %v92
    %94 = vst [vmem:[#allocation2] sm:$0xff] %v93
    // Predicated region
    $region10: #{tpu_custom_call.1} parent=1 // pred_check
      _
    $region11: #{tpu_custom_call.1} parent=1 // pred_check_branch
      %96 = sbr.rel (0) target = $region13
    $region12: #{tpu_custom_call.1} parent=1 // pred_region
      %98 = vsyncadd [#allocation3], 0
      %s100 = sshll.u32 [#allocation2], 4
      %s101 = int_to_ptr.vmem [resolvable:$true] %s100
      %s102 = sshll.u32 %s2, 4
      %s103 = int_to_ptr.hbm [resolvable:$true] %s102
      %105 = dma.vmem_to_hbm [thread:$0]  %s101, 128, %s103, [#allocation3]
    $region13: #{tpu_custom_call.1} parent=1 // pred_fallthru
      _
    // Predicated region
    $region14: #{tpu_custom_call.1} parent=1 // pred_check
      _
    $region15: #{tpu_custom_call.1} parent=1 // pred_check_branch
      %107 = sbr.rel (0) target = $region17
    $region16: #{tpu_custom_call.1} parent=1 // pred_region
      %109 = dma.done [#allocation3], 128
    $region17: #{tpu_custom_call.1} parent=1 // pred_fallthru
      _
    %110 = vsyncpa [#allocation3], 1

// kernel: tpu_custom_call.1
$region0: #{tpu_custom_call.1}
  #allocation0 [shape = 'u32[]', space=smem, size = 0x4, offset = 0x4, fixed_abs, tag = 'smem constant byte address 0x4 - core index']
  #allocation1 [shape = 'u32[72,128]{1,0:T(1,128)}', space=vmem, size = 0x9000, scoped, tag = 'internal scratch']
  %s0 = inlined_call_operand.vmem [shape: f32[8,2], index: 0, kind: input, shape index: {}]
  %s1 = inlined_call_operand.vmem [shape: f32[2,128], index: 1, kind: input, shape index: {}]
  %s2 = inlined_call_operand.hbm [shape: f32[8,128], index: 2, kind: output, shape index: {}]
  %s3 = sld [smem:[#allocation0]]
  $region18: #{tpu_custom_call.1} parent=0
    _
  %s5 = ssub.s32 1, %s3
  %s6 = scalar_select 0, %s5, %s3
  $region1: #{tpu_custom_call.1} parent=0
    #allocation2 [shape = 'u8[4096]{0}', space=vmem, size = 0x1000, scoped, tag = 'output window, operand 0, single buffered']
    #allocation3 [shape = 's32[1]{0}', space=sflag, size = 0x4, scoped, tag = 'scoped memory for tpu_custom_call.1']
    %7 = vsyncpa [#allocation3], 0
    // Predicated region
    $region2: #{tpu_custom_call.1} parent=1 // pred_check
      _
    $region3: #{tpu_custom_call.1} parent=1 // pred_check_branch
      %9 = sbr.rel (0) target = $region5
    $region4: #{tpu_custom_call.1} parent=1 // pred_region
      _
    $region5: #{tpu_custom_call.1} parent=1 // pred_fallthru
      _
    // Predicated region
    $region6: #{tpu_custom_call.1} parent=1 // pred_check
      _
    $region7: #{tpu_custom_call.1} parent=1 // pred_check_branch
      %11 = sbr.rel (0) target = $region9
    $region8: #{tpu_custom_call.1} parent=1 // pred_region
      _
    $region9: #{tpu_custom_call.1} parent=1 // pred_fallthru
      _
    %v12 = vld [vmem:[%s0] sm:$0xff]
    %v13 = vmul.f32 %v12, %v12
    %vm14 = vcmask 15360
    %v15 = vsel %vm14, %v13, 0.0
    %16 = vadd.xlane.f32.xlu0 %v15
    %v17 = vpop.xlane.xlu0 %16
    %v18 = vmax.f32 %v17, 1e-24
    %v19 = vrsqrt.pop %v18
    %v20 = vmul.f32 %v19, %v18
    %v21 = vmul.f32 %v20, %v19
    %v22 = vmul.f32 0.5, %v21
    %v23 = vsub.f32 1.5, %v22
    %v24 = vmul.f32 %v19, %v23
    %vm25 = vweird.f32 %v18
    %vm26 = vweird.f32 %v19
    %vm27 = vmor %vm25, %vm26
    %v28 = vsel %vm27, %v19, %v24
    %v29 = vld [vmem:[%s1] sm:$0x3]
    %v31 = vsel %vm14, %v12, 0
    %vm33 = vcmask 1041408
    %v35 = vsel %vm33, %v29, 0
    %37 = vmatpush.msra.mxu0 0.0
    %38 = vmatpush.msra.mxu0 0.0
    %39 = vmatpush.msra.mxu0 0.0
    %40 = vmatpush.msra.mxu0 0.0
    %41 = vmatpush.msra.mxu0 0.0
    %42 = vmatpush.msra.mxu0 0.0
    %43 = vmatpush.msra.mxu0 0.0
    %44 = vmatpush.msra.mxu0 0.0
    %45 = vmatpush.msra.mxu0 0.0
    %46 = vmatpush.msra.mxu0 0.0
    %47 = vmatpush.msra.mxu0 0.0
    %48 = vmatpush.msra.mxu0 0.0
    %49 = vmatpush.msra.mxu0 0.0
    %50 = vmatpush.msra.mxu0 0.0
    %51 = vmatpush.msra.mxu0 0.0
    %52 = vmatpush.msra.mxu0 %v35
    %53 = vmatmul.f32.gmra.mxu0 %v31
    %v54 = vpop.f32.mrf.mxu0
    %v55 = vadd.f32 0.0, %v54
    %56 = vdwg.mxu0
    %v57 = vmul.f32 %v28, 0.1
    %v58 = vmul.f32 %v55, %v57
    %v59 = vmul.f32 %v58, %v58
    %v60 = vsub.f32 1.0, %v59
    %v61 = vmax.f32 %v60, 0.0
    %v62 = vrsqrt.pop %v61
    %v63 = vmul.f32 %v62, %v61
    %v64 = vmul.f32 %v63, %v62
    %v65 = vmul.f32 0.5, %v64
    %v66 = vsub.f32 1.5, %v65
    %v67 = vmul.f32 %v62, %v66
    %v68 = vmul.f32 %v61, %v67
    %vm69 = vcmp.eq.f32.partialorder %v61, inf
    %v70 = vsel %vm69, %v61, %v68
    %vm71 = vcmp.eq.f32.partialorder %v61, 0.0
    %v72 = vand.u32 %v61, 2147483648
    %v73 = vsel %vm71, %v72, %v70
    %v74 = vmul.f32 %v58, 0.5403023
    %v75 = vmul.f32 %v73, 0.84147096
    %v76 = vsub.f32 %v74, %v75
    %v77 = vmul.f32 %v76, 10.0
    %v78 = vmul.f32 %v58, 10.0
    %v79 = vmul.f32 %v78, 1.442695
    %v80 = vpow.pop %v79
    %v81 = vmul.f32 %v77, 1.442695
    %v82 = vpow.pop %v81
    %v83 = vlaneseq
    %v84 = vand.u32 %v83, 127
    %vm85 = vcmp.lt.s32.totalorder %v84, 10
    %v86 = vsel %vm85, %v80, 0.0
    %87 = vadd.xlane.f32.xlu0 %v86
    %v88 = vpop.xlane.xlu0 %87
    %v89 = vsub.f32 %v88, %v86
    %v90 = vadd.f32 %v89, %v82
    %v91 = vlog2.pop %v90
    %v92 = vmul.f32 %v91, 0.6931472
    %v93 = vsub.f32 %v77, %v92
    %94 = vst [vmem:[#allocation2] sm:$0xff] %v93
    // Predicated region
    $region10: #{tpu_custom_call.1} parent=1 // pred_check
      _
    $region11: #{tpu_custom_call.1} parent=1 // pred_check_branch
      %96 = sbr.rel (0) target = $region13
    $region12: #{tpu_custom_call.1} parent=1 // pred_region
      %98 = vsyncadd [#allocation3], 0
      %s100 = sshll.u32 [#allocation2], 4
      %s101 = int_to_ptr.vmem [resolvable:$true] %s100
      %s102 = sshll.u32 %s2, 4
      %s103 = int_to_ptr.hbm [resolvable:$true] %s102
      %105 = dma.vmem_to_hbm [thread:$0]  %s101, 128, %s103, [#allocation3]
    $region13: #{tpu_custom_call.1} parent=1 // pred_fallthru
      _
    // Predicated region
    $region14: #{tpu_custom_call.1} parent=1 // pred_check
      _
    $region15: #{tpu_custom_call.1} parent=1 // pred_check_branch
      %107 = sbr.rel (0) target = $region17
    $region16: #{tpu_custom_call.1} parent=1 // pred_region
      %109 = dma.done [#allocation3], 128
    $region17: #{tpu_custom_call.1} parent=1 // pred_fallthru
      _
    %110 = vsyncpa [#allocation3], 1

</llo_original>
